<compile_context>
chip_gen: v7x
topology: tpu7x:2x2x1
jax: 0.10.0
libtpu: 0.0.40
codegen_flags: <defaults>
</compile_context>

<pallas_src>
import jax
import jax.numpy as jnp
from jax.experimental import pallas as pl
from jax.experimental.pallas import tpu as pltpu

ALPHA = 0.5
BETA = 0.5       # unused by forward (kept for parity with module __init__)
GAMMA = 1.0      # unused by forward
SIGMA = 1.0      # unused by forward
LOSS_WEIGHT = 1.0
EPS = 1e-7


def _round_up(x, m):
    return ((x + m - 1) // m) * m


def _energy_partial_kernel(dec_ref, tgt_ref, w_ref, out_ref):
    """Per-tile partial sums.

    dec_ref, tgt_ref : (TG, 2P) f32 VMEM
    w_ref            : (TG, 1)  f32 VMEM
    out_ref          : (8, 128) f32 VMEM — [0,0] = sum(|(d-t)*w|), [0,1] = sum(w), rest 0
    """
    # Stage 1: lane (point/xy) reduction on the XLU.
    diff = jnp.abs(dec_ref[...] - tgt_ref[...])              # (TG, 2P)  VPU
    row = jnp.sum(diff, axis=-1, keepdims=True)              # (TG, 1)   XLU lane reduce
    # Stage 2: per-gt weighting (G multiplies), sublane reduce to scalars.
    w = w_ref[...]                                           # (TG, 1)
    # |(d - t) * w| == |d - t| * |w|  -> exact match to reference, incl. negative w.
    e_partial = jnp.sum(row * jnp.abs(w))
    w_partial = jnp.sum(w)

    # Lane-dense, unmasked full-tile store of the two partials (rest exact zeros).
    sub = jax.lax.broadcasted_iota(jnp.int32, (8, 128), 0)
    lane = jax.lax.broadcasted_iota(jnp.int32, (8, 128), 1)
    out_ref[...] = jnp.where(
        (sub == 0) & (lane == 0), e_partial,
        jnp.where((sub == 0) & (lane == 1), w_partial, jnp.float32(0.0)))


def snake_energy_loss(decoded_snakes, pred_energy_maps, points, snake_targets,
                      snake_weights, weight=None, avg_factor=None,
                      reduction_override=None,
                      alpha=ALPHA, loss_weight=LOSS_WEIGHT,
                      tile_gt=512):
    """Pallas forward for SnakeEnergyLoss (mean-style normalization, as in reference)."""
    assert reduction_override in (None, "none", "mean", "sum")
    # TODO(synk): reduction_override / weight / avg_factor are accepted but, like the
    # reference energy(), do not change the computed loss.

    num_gt, num_point, two = decoded_snakes.shape
    assert two == 2
    lanes = 2 * num_point

    # Tile over num_gt: largest tile up to `tile_gt` rows, multiple of 8.
    tg = min(_round_up(tile_gt, 8), _round_up(num_gt, 8))
    g_pad = _round_up(num_gt, tg)
    num_tiles = g_pad // tg

    dec2d = decoded_snakes.reshape(num_gt, lanes).astype(jnp.float32)
    tgt2d = snake_targets.reshape(num_gt, lanes).astype(jnp.float32)
    w2d = snake_weights.reshape(num_gt, 1).astype(jnp.float32)
    if g_pad != num_gt:
        pad = g_pad - num_gt
        dec2d = jnp.pad(dec2d, ((0, pad), (0, 0)))
        tgt2d = jnp.pad(tgt2d, ((0, pad), (0, 0)))
        w2d = jnp.pad(w2d, ((0, pad), (0, 0)))   # zero weight -> zero contribution

    cost = pl.CostEstimate(
        flops=4 * g_pad * lanes,
        transcendentals=0,
        bytes_accessed=(2 * g_pad * lanes + g_pad + num_tiles * 8 * 128) * 4,
    )

    partials = pl.pallas_call(
        _energy_partial_kernel,
        out_shape=jax.ShapeDtypeStruct((num_tiles * 8, 128), jnp.float32),
        grid_spec=pltpu.PrefetchScalarGridSpec(
            num_scalar_prefetch=0,
            grid=(num_tiles,),
            in_specs=[
                pl.BlockSpec((tg, lanes), lambda i: (i, 0)),
                pl.BlockSpec((tg, lanes), lambda i: (i, 0)),
                pl.BlockSpec((tg, 1), lambda i: (i, 0)),
            ],
            out_specs=pl.BlockSpec((8, 128), lambda i: (i, 0)),
        ),
        compiler_params=pltpu.CompilerParams(
            dimension_semantics=("parallel",),
        ),
        cost_estimate=cost,
    )(dec2d, tgt2d, w2d)

    # Non-data rows/lanes were stored as exact zeros, so full-column sums are safe.
    e_total = jnp.sum(partials[:, 0])
    w_total = jnp.sum(partials[:, 1])
    scale = jnp.float32(alpha * loss_weight)          # folded constant
    return scale * e_total / (w_total * num_point + EPS)


def _reference(decoded_snakes, snake_targets, snake_weights,
               alpha=ALPHA, loss_weight=LOSS_WEIGHT):
    num_gt, num_point, _ = decoded_snakes.shape
    w_ = snake_weights.reshape(num_gt, 1, 1)
    energy_1 = alpha * jnp.sum(jnp.abs((decoded_snakes - snake_targets) * w_))
    return loss_weight * energy_1 / (jnp.sum(snake_weights) * num_point + EPS)


if __name__ == "__main__":
    key = jax.random.PRNGKey(0)
    k1, k2, k3, k4, k5 = jax.random.split(key, 5)

    # --- Case 1: small, positive weights (original demo shape) ---
    num_gt, num_point = 8, 16
    decoded_snakes = jax.random.normal(k1, (num_gt, num_point, 2), dtype=jnp.float32)
    snake_targets = jax.random.normal(k2, (num_gt, num_point, 2), dtype=jnp.float32)
    snake_weights = jax.random.uniform(k3, (num_gt,), dtype=jnp.float32)
    pred_energy_maps = jax.random.normal(k4, (num_gt, 1, 32, 32), dtype=jnp.float32)
    points = jax.random.normal(k4, (num_gt, num_point, 2), dtype=jnp.float32)

    loss = snake_energy_loss(decoded_snakes, pred_energy_maps, points,
                             snake_targets, snake_weights)
    loss = jax.block_until_ready(loss)
    ref = _reference(decoded_snakes, snake_targets, snake_weights)
    assert jnp.allclose(loss, ref, rtol=1e-5, atol=1e-6), (loss, ref)

    # --- Case 2: mixed-sign weights + non-multiple-of-8 num_gt + multi-tile grid ---
    num_gt2, num_point2 = 20, 16
    dec2 = jax.random.normal(k5, (num_gt2, num_point2, 2), dtype=jnp.float32)
    tgt2 = jax.random.normal(k2, (num_gt2, num_point2, 2), dtype=jnp.float32)
    w2 = jax.random.uniform(k3, (num_gt2,), dtype=jnp.float32, minval=0.2, maxval=1.0)
    w2 = w2.at[1].set(-w2[1]).at[7].set(-w2[7])   # exercise |(d-t)*w| with negative w
    loss2 = snake_energy_loss(dec2, None, None, tgt2, w2, tile_gt=8)  # forces 3 tiles
    loss2 = jax.block_until_ready(loss2)
    ref2 = _reference(dec2, tgt2, w2)
    assert jnp.allclose(loss2, ref2, rtol=1e-5, atol=1e-6), (loss2, ref2)

    print("KERNEL_OK")
</pallas_src>

<mosaic_0001>
module attributes {stable_mosaic.version = 11 : i64} {
  func.func @_energy_partial_kernel(%arg0: i32, %arg1: memref<8x32xf32, #tpu.memory_space<vmem>>, %arg2: memref<8x32xf32, #tpu.memory_space<vmem>>, %arg3: memref<8x1xf32, #tpu.memory_space<vmem>>, %arg4: memref<8x128xf32, #tpu.memory_space<vmem>>) attributes {dimension_semantics = [#tpu.dimension_semantics<parallel>], iteration_bounds = array<i64: 1>, scalar_prefetch = 0 : i64, scratch_operands = 0 : i64, tpu.core_type = #tpu.core_type<tc>, window_params = [{transform_indices = @transform_0, window_bounds = array<i64: 8, 32>}, {transform_indices = @transform_1, window_bounds = array<i64: 8, 32>}, {transform_indices = @transform_2, window_bounds = array<i64: 8, 1>}, {transform_indices = @transform_3, window_bounds = array<i64: 8, 128>}]} {
    %c0 = arith.constant 0 : index
    %c0_0 = arith.constant 0 : index
    %0 = vector.load %arg1[%c0, %c0_0] : memref<8x32xf32, #tpu.memory_space<vmem>>, vector<8x32xf32>
    %c0_1 = arith.constant 0 : index
    %c0_2 = arith.constant 0 : index
    %1 = vector.load %arg2[%c0_1, %c0_2] : memref<8x32xf32, #tpu.memory_space<vmem>>, vector<8x32xf32>
    %2 = arith.subf %0, %1 : vector<8x32xf32>
    %3 = math.absf %2 : vector<8x32xf32>
    %cst = arith.constant dense<0.000000e+00> : vector<8xf32>
    %4 = vector.multi_reduction <add>, %3, %cst [1] : vector<8x32xf32> to vector<8xf32>
    %5 = vector.shape_cast %4 : vector<8xf32> to vector<8x1xf32>
    %c0_3 = arith.constant 0 : index
    %c0_4 = arith.constant 0 : index
    %6 = vector.load %arg3[%c0_3, %c0_4] : memref<8x1xf32, #tpu.memory_space<vmem>>, vector<8x1xf32>
    %7 = math.absf %6 : vector<8x1xf32>
    %8 = arith.mulf %5, %7 : vector<8x1xf32>
    %9 = vector.shape_cast %8 : vector<8x1xf32> to vector<1x8x1xf32>
    %cst_5 = arith.constant dense<0.000000e+00> : vector<1xf32>
    %10 = vector.multi_reduction <add>, %9, %cst_5 [1, 2] : vector<1x8x1xf32> to vector<1xf32>
    %11 = vector.shape_cast %10 : vector<1xf32> to vector<1x1x1xf32>
    %12 = vector.extract %11[0, 0, 0] : f32 from vector<1x1x1xf32>
    %13 = vector.shape_cast %6 : vector<8x1xf32> to vector<1x8x1xf32>
    %cst_6 = arith.constant dense<0.000000e+00> : vector<1xf32>
    %14 = vector.multi_reduction <add>, %13, %cst_6 [1, 2] : vector<1x8x1xf32> to vector<1xf32>
    %15 = vector.shape_cast %14 : vector<1xf32> to vector<1x1x1xf32>
    %16 = vector.extract %15[0, 0, 0] : f32 from vector<1x1x1xf32>
    %17 = tpu.iota {dimensions = array<i32: 0>} : vector<8x128xi32>
    %18 = tpu.iota {dimensions = array<i32: 1>} : vector<8x128xi32>
    %c0_i32 = arith.constant 0 : i32
    %19 = vector.broadcast %c0_i32 : i32 to vector<8x128xi32>
    %20 = arith.cmpi eq, %17, %19 : vector<8x128xi32>
    %c0_i32_7 = arith.constant 0 : i32
    %21 = vector.broadcast %c0_i32_7 : i32 to vector<8x128xi32>
    %22 = arith.cmpi eq, %18, %21 : vector<8x128xi32>
    %23 = arith.andi %20, %22 : vector<8x128xi1>
    %c0_i32_8 = arith.constant 0 : i32
    %24 = vector.broadcast %c0_i32_8 : i32 to vector<8x128xi32>
    %25 = arith.cmpi eq, %17, %24 : vector<8x128xi32>
    %c1_i32 = arith.constant 1 : i32
    %26 = vector.broadcast %c1_i32 : i32 to vector<8x128xi32>
    %27 = arith.cmpi eq, %18, %26 : vector<8x128xi32>
    %28 = arith.andi %25, %27 : vector<8x128xi1>
    %cst_9 = arith.constant 0.000000e+00 : f32
    %29 = vector.broadcast %16 : f32 to vector<8x128xf32>
    %30 = vector.broadcast %cst_9 : f32 to vector<8x128xf32>
    %31 = arith.select %28, %29, %30 : vector<8x128xi1>, vector<8x128xf32>
    %32 = vector.broadcast %12 : f32 to vector<8x128xf32>
    %33 = arith.select %23, %32, %31 : vector<8x128xi1>, vector<8x128xf32>
    %c0_10 = arith.constant 0 : index
    %c0_11 = arith.constant 0 : index
    %34 = vector.load %arg4[%c0_10, %c0_11] : memref<8x128xf32, #tpu.memory_space<vmem>>, vector<8x128xf32>
    tpu.vector_store %arg4[%c0_10, %c0_11], %33 {strides = array<i32>} : memref<8x128xf32, #tpu.memory_space<vmem>>, vector<8x128xf32>,
    return
  }
  func.func @transform_0(%arg0: i32) -> (i32, i32) {
    %c0_i32 = arith.constant 0 : i32
    %c0_i32_0 = arith.constant 0 : i32
    return %arg0, %c0_i32 : i32, i32
  }
  func.func @transform_1(%arg0: i32) -> (i32, i32) {
    %c0_i32 = arith.constant 0 : i32
    %c0_i32_0 = arith.constant 0 : i32
    return %arg0, %c0_i32 : i32, i32
  }
  func.func @transform_2(%arg0: i32) -> (i32, i32) {
    %c0_i32 = arith.constant 0 : i32
    %c0_i32_0 = arith.constant 0 : i32
    return %arg0, %c0_i32 : i32, i32
  }
  func.func @transform_3(%arg0: i32) -> (i32, i32) {
    %c0_i32 = arith.constant 0 : i32
    %c0_i32_0 = arith.constant 0 : i32
    return %arg0, %c0_i32 : i32, i32
  }
}

</mosaic_0001>

<llo_original>
// kernel: tpu_custom_call.1
$region0: #{tpu_custom_call.1}
  #allocation0 [shape = 'u32[]', space=smem, size = 0x4, offset = 0x4, fixed_abs, tag = 'smem constant byte address 0x4 - core index']
  #allocation1 [shape = 'u32[144,128]{1,0:T(1,128)}', space=vmem, size = 0x12000, scoped, tag = 'internal scratch']
  %s0 = inlined_call_operand.vmem [shape: f32[8,32], index: 0, kind: input, shape index: {}]
  %s1 = inlined_call_operand.hbm [shape: f32[8,32], index: 1, kind: input, shape index: {}]
  %s2 = inlined_call_operand.vmem [shape: f32[8,1], index: 2, kind: input, shape index: {}]
  %s3 = inlined_call_operand.hbm [shape: f32[8,128], index: 3, kind: output, shape index: {}]
  %s4 = sld [smem:[#allocation0]]
  $region26: #{tpu_custom_call.1} parent=0
    _
  %s6 = ssub.s32 1, %s4
  %s7 = scalar_select 0, %s6, %s4
  $region1: #{tpu_custom_call.1} parent=0
    #allocation2 [shape = 'u8[4096]{0}', space=vmem, size = 0x1000, scoped, tag = 'input window, operand 1, single buffered']
    #allocation3 [shape = 's32[1]{0}', space=sflag, size = 0x4, scoped, tag = 'scoped memory for tpu_custom_call.1']
    #allocation4 [shape = 's32[1]{0}', space=sflag, size = 0x4, scoped, tag = 'scoped memory for tpu_custom_call.1']
    #allocation5 [shape = 'u8[4096]{0}', space=vmem, size = 0x1000, scoped, tag = 'output window, operand 0, single buffered']
    %8 = vsyncpa [#allocation3], 0
    %9 = vsyncpa [#allocation4], 0
    // Predicated region
    $region2: #{tpu_custom_call.1} parent=1 // pred_check
      _
    $region3: #{tpu_custom_call.1} parent=1 // pred_check_branch
      %11 = sbr.rel (0) target = $region5
    $region4: #{tpu_custom_call.1} parent=1 // pred_region
      _
    $region5: #{tpu_custom_call.1} parent=1 // pred_fallthru
      _
    // Predicated region
    $region6: #{tpu_custom_call.1} parent=1 // pred_check
      _
    $region7: #{tpu_custom_call.1} parent=1 // pred_check_branch
      %13 = sbr.rel (0) target = $region9
    $region8: #{tpu_custom_call.1} parent=1 // pred_region
      %s15 = ssub.s32 128, 128
      %16 = vsyncadd [#allocation3], %s15
      %s18 = sshll.u32 [#allocation2], 4
      %s19 = int_to_ptr.vmem [resolvable:$true] %s18
      %21 = dma.hbm_to_vmem [thread:$0]  %s1, 128, %s19, [#allocation3]
    $region9: #{tpu_custom_call.1} parent=1 // pred_fallthru
      _
    // Predicated region
    $region10: #{tpu_custom_call.1} parent=1 // pred_check
      _
    $region11: #{tpu_custom_call.1} parent=1 // pred_check_branch
      %23 = sbr.rel (0) target = $region13
    $region12: #{tpu_custom_call.1} parent=1 // pred_region
      _
    $region13: #{tpu_custom_call.1} parent=1 // pred_fallthru
      _
    // Predicated region
    $region14: #{tpu_custom_call.1} parent=1 // pred_check
      _
    $region15: #{tpu_custom_call.1} parent=1 // pred_check_branch
      %25 = sbr.rel (0) target = $region17
    $region16: #{tpu_custom_call.1} parent=1 // pred_region
      %26 = dma.done [#allocation3], 128
    $region17: #{tpu_custom_call.1} parent=1 // pred_fallthru
      _
    %v27 = vld [vmem:[%s0] sm:$0xff]
    %v28 = vld [vmem:[#allocation2] sm:$0xff]
    %v29 = vsub.f32 %v27, %v28
    %v30 = vand.u32 2147483647, %v29
    %vm31 = vcmask 261120
    %v32 = vsel %vm31, %v30, 0.0
    %33 = vadd.xlane.f32.xlu0 %v32
    %v34 = vpop.xlane.xlu0 %33
    %v35 = vld [vmem:[%s2] sm:$0xff]
    %v36 = vand.u32 2147483647, %v35
    %v37 = vmul.f32 %v34, %v36
    %vm38 = vcmask 7168
    %v39 = vsel %vm38, %v37, 0.0
    %40 = vadd.xlane.f32.xlu0 %v39
    %v41 = vpop.xlane.xlu0 %40
    %v42 = vrot.slane %v41, 4
    %v43 = vadd.f32 %v41, %v42
    %v44 = vrot.slane %v43, 2
    %v45 = vadd.f32 %v43, %v44
    %v46 = vrot.slane %v45, 1
    %v47 = vadd.f32 %v45, %v46
    %s48 = vtos %v47
    %v49 = vsel %vm38, %v35, 0.0
    %50 = vadd.xlane.f32.xlu0 %v49
    %v51 = vpop.xlane.xlu0 %50
    %v52 = vrot.slane %v51, 4
    %v53 = vadd.f32 %v51, %v52
    %v54 = vrot.slane %v53, 2
    %v55 = vadd.f32 %v53, %v54
    %v56 = vrot.slane %v55, 1
    %v57 = vadd.f32 %v55, %v56
    %s58 = vtos %v57
    %v59 = vlaneseq
    %v60 = vshrl.u32 %v59, 7
    %v61 = vlaneseq
    %v62 = vand.u32 %v61, 127
    %vm63 = vcmp.eq.s32.totalorder %v60, 0
    %vm64 = vcmp.eq.s32.totalorder %v62, 0
    %vm65 = vmand %vm63, %vm64
    %vm66 = vcmp.eq.s32.totalorder %v62, 1
    %vm67 = vmand %vm63, %vm66
    %v68 = vstv %s58
    %v69 = vsel %vm67, %v68, 0.0
    %v70 = vstv %s48
    %v71 = vsel %vm65, %v70, %v69
    %72 = vst [vmem:[#allocation5] sm:$0xff] %v71
    // Predicated region
    $region18: #{tpu_custom_call.1} parent=1 // pred_check
      _
    $region19: #{tpu_custom_call.1} parent=1 // pred_check_branch
      %74 = sbr.rel (0) target = $region21
    $region20: #{tpu_custom_call.1} parent=1 // pred_region
      %s76 = ssub.s32 128, 128
      %77 = vsyncadd [#allocation4], %s76
      %s79 = sshll.u32 [#allocation5], 4
      %s80 = int_to_ptr.vmem [resolvable:$true] %s79
      %82 = dma.vmem_to_hbm [thread:$0]  %s80, 128, %s3, [#allocation4]
    $region21: #{tpu_custom_call.1} parent=1 // pred_fallthru
      _
    // Predicated region
    $region22: #{tpu_custom_call.1} parent=1 // pred_check
      _
    $region23: #{tpu_custom_call.1} parent=1 // pred_check_branch
      %84 = sbr.rel (0) target = $region25
    $region24: #{tpu_custom_call.1} parent=1 // pred_region
      %85 = dma.done [#allocation4], 128
    $region25: #{tpu_custom_call.1} parent=1 // pred_fallthru
      _
    %86 = vsyncpa [#allocation3], 1
    %87 = vsyncpa [#allocation4], 1

</llo_original>
